<compile_context>
chip_gen: v7x
topology: tpu7x:2x2x1
jax: 0.10.0
libtpu: 0.0.40
codegen_flags: <defaults>
</compile_context>

<pallas_src>
import functools

import jax
import jax.numpy as jnp
from jax import lax
from jax.experimental import pallas as pl
from jax.experimental.pallas import tpu as pltpu


def _make_lc2d_kernel(o_channels, has_bias):
    """Kernel blocks: x (CK, Pp), w (O, CK, Pp), [b (O, Pp)], out (O, Pp)."""

    def kernel(x_ref, w_ref, *rest):
        if has_bias:
            b_ref, o_ref = rest
        else:
            (o_ref,) = rest

        x = x_ref[...].astype(jnp.float32)                       # (CK, Pp): this batch element
        for o in range(o_channels):                              # static unroll over out-channels
            w_o = w_ref[o].astype(jnp.float32)                   # (CK, Pp): per-o slab from VMEM
            acc = jnp.sum(x * w_o, axis=0, keepdims=True)        # sublane reduce -> (1, Pp)
            if has_bias:
                acc = acc + b_ref[o:o + 1, :].astype(jnp.float32)
            o_ref[o:o + 1, :] = acc.astype(o_ref.dtype)          # lane-dense direct row store

    return kernel


def _pad_lanes(a, p_pad):
    """Zero-pad the last (lane) axis of `a` up to p_pad."""
    pad = p_pad - a.shape[-1]
    if pad == 0:
        return a
    widths = [(0, 0)] * (a.ndim - 1) + [(0, pad)]
    return jnp.pad(a, widths)


def _extract_patches(x, kh, kw, dh, dw):
    """(N, C, H, W) -> (N, C*kh*kw, Ho*Wo) via static (strided) slices; no gather HLO."""
    N, C, H, W = x.shape
    Ho = (H - kh) // dh + 1
    Wo = (W - kw) // dw + 1
    if kh == 1 and kw == 1 and dh == 1 and dw == 1:
        # Production LC layer path: pure reshape, zero copy -> extraction is fused into the
        # pallas_call's own HBM->VMEM DMA.
        return x.reshape(N, C, H * W), Ho, Wo
    slabs = []
    for ki in range(kh):
        for kj in range(kw):
            slabs.append(lax.slice(
                x,
                (0, 0, ki, kj),
                (N, C, ki + (Ho - 1) * dh + 1, kj + (Wo - 1) * dw + 1),
                (1, 1, dh, dw)))                                 # (N, C, Ho, Wo)
    patches = jnp.stack(slabs, axis=2)                           # (N, C, kh*kw, Ho, Wo)
    return patches.reshape(N, C * kh * kw, Ho * Wo), Ho, Wo


def prepare_lc2d_params(weight, bias, lane_multiple=128):
    """weight (1,O,C,Ho,Wo,K*K), bias (1,O,Ho,Wo) or None -> kernel layouts.

    Pure function of the parameters; call once (hoisted out of the per-forward path).
    Returns w_t (O, C*KK, P_pad) and b_t (O, P_pad) or None, with P_pad a 128 multiple
    and zero-filled pad lanes.
    """
    _, O, C, Ho, Wo, KK = weight.shape
    P = Ho * Wo
    P_pad = ((P + lane_multiple - 1) // lane_multiple) * lane_multiple
    # (O, C, Ho, Wo, KK) -> (O, C, KK, Ho, Wo) -> (O, C*KK, Ho*Wo): contraction axis (c, kk)
    # matches the PyTorch unfold ordering (c outer, ki*kw+kj inner).
    w_t = jnp.transpose(weight[0], (0, 1, 4, 2, 3)).reshape(O, C * KK, P)
    w_t = _pad_lanes(w_t, P_pad)
    b_t = None if bias is None else _pad_lanes(bias[0].reshape(O, P), P_pad)
    return w_t, b_t


def locally_connected_2d(x, w_t, b_t, *, kernel_size, stride):
    """x: (N, C, H, W); w_t/b_t from prepare_lc2d_params.  Returns (N, O, Ho, Wo)."""
    N = x.shape[0]
    patches, Ho, Wo = _extract_patches(x, kernel_size, kernel_size, stride, stride)
    P = Ho * Wo
    O, CK, Pp = w_t.shape
    assert patches.shape[1] == CK, "weight layout does not match unfolded input"
    patches = _pad_lanes(patches, Pp)                            # zero-fill pad lanes

    kernel = _make_lc2d_kernel(O, b_t is not None)
    in_specs = [
        pl.BlockSpec((None, CK, Pp), lambda n: (n, 0, 0)),       # one batch element per step
        pl.BlockSpec((O, CK, Pp), lambda n: (0, 0, 0)),          # weight: constant -> one DMA
    ]
    args = [patches, w_t]
    if b_t is not None:
        in_specs.append(pl.BlockSpec((O, Pp), lambda n: (0, 0)))
        args.append(b_t)

    out = pl.pallas_call(
        kernel,
        out_shape=jax.ShapeDtypeStruct((N, O, Pp), x.dtype),
        grid=(N,),                                               # batch grid axis
        in_specs=in_specs,
        out_specs=pl.BlockSpec((None, O, Pp), lambda n: (n, 0, 0)),
        compiler_params=pltpu.CompilerParams(
            dimension_semantics=("parallel",)),                  # megacore split on v7x
    )(*args)
    return out[:, :, :P].reshape(N, O, Ho, Wo)


def _reference(x, weight, bias, *, kernel_size, stride):
    """Pure-JAX mirror of the PyTorch forward."""
    kh = kw = kernel_size
    dh = dw = stride
    N, C, H, W = x.shape
    Ho = (H - kh) // dh + 1
    Wo = (W - kw) // dw + 1
    i_idx = (jnp.arange(Ho) * dh)[:, None] + jnp.arange(kh)[None, :]     # (Ho, kh)
    j_idx = (jnp.arange(Wo) * dw)[:, None] + jnp.arange(kw)[None, :]     # (Wo, kw)
    patches = x[:, :, i_idx[:, None, :, None], j_idx[None, :, None, :]]  # (N,C,Ho,Wo,kh,kw)
    patches = patches.reshape(N, C, Ho, Wo, kh * kw)
    out = jnp.sum(patches[:, None] * weight, axis=(2, -1))
    if bias is not None:
        out = out + bias
    return out


if __name__ == "__main__":
    key = jax.random.PRNGKey(0)
    k1, k2, k3, k4, k5 = jax.random.split(key, 5)

    # --- Config A: generic window (k=3, s=2) with bias. ---
    N, C, H, W = 2, 4, 16, 16
    O, ks, st = 8, 3, 2
    Ho = (H - ks) // st + 1
    Wo = (W - ks) // st + 1
    x_a = jax.random.normal(k1, (N, C, H, W), dtype=jnp.float32)
    w_a = jax.random.normal(k2, (1, O, C, Ho, Wo, ks * ks), dtype=jnp.float32)
    b_a = jax.random.normal(k3, (1, O, Ho, Wo), dtype=jnp.float32)

    w_t_a, b_t_a = prepare_lc2d_params(w_a, b_a)          # hoisted: parameters only
    fwd_a = jax.jit(functools.partial(locally_connected_2d, kernel_size=ks, stride=st))
    out_a = jax.block_until_ready(fwd_a(x_a, w_t_a, b_t_a))
    ref_a = _reference(x_a, w_a, b_a, kernel_size=ks, stride=st)
    assert out_a.shape == (N, O, Ho, Wo)
    assert jnp.allclose(out_a, ref_a, atol=1e-4, rtol=1e-4), "config A mismatch vs reference"

    # --- Config B: scaled-down analogue of CNN's LocallyConnected2d(64,64,(16,8),1,1,bias=False).
    #     Ho*Wo = 128 -> lanes already dense, patch extraction is a pure reshape (fully fused).
    N2, C2, H2, W2 = 2, 8, 16, 8
    O2, ks2, st2 = 8, 1, 1
    x_b = jax.random.normal(k4, (N2, C2, H2, W2), dtype=jnp.float32)
    w_b = jax.random.normal(k5, (1, O2, C2, H2, W2, 1), dtype=jnp.float32)

    w_t_b, b_t_b = prepare_lc2d_params(w_b, None)
    fwd_b = jax.jit(functools.partial(locally_connected_2d, kernel_size=ks2, stride=st2))
    out_b = jax.block_until_ready(fwd_b(x_b, w_t_b, b_t_b))
    ref_b = _reference(x_b, w_b, None, kernel_size=ks2, stride=st2)
    assert out_b.shape == (N2, O2, H2, W2)
    assert jnp.allclose(out_b, ref_b, atol=1e-4, rtol=1e-4), "config B mismatch vs reference"

    print("KERNEL_OK")
</pallas_src>

<mosaic_0001>
module attributes {stable_mosaic.version = 11 : i64} {
  func.func @kernel(%arg0: i32, %arg1: memref<1x36x128xf32, #tpu.memory_space<vmem>>, %arg2: memref<8x36x128xf32, #tpu.memory_space<vmem>>, %arg3: memref<8x128xf32, #tpu.memory_space<vmem>>, %arg4: memref<1x8x128xf32, #tpu.memory_space<vmem>>) attributes {dimension_semantics = [#tpu.dimension_semantics<parallel>], iteration_bounds = array<i64: 2>, scalar_prefetch = 0 : i64, scratch_operands = 0 : i64, tpu.core_type = #tpu.core_type<tc>, window_params = [{transform_indices = @transform_0, window_bounds = array<i64: 1, 36, 128>}, {pipeline_mode = #tpu.pipeline_mode<synchronous>, transform_indices = @transform_1, window_bounds = array<i64: 8, 36, 128>}, {pipeline_mode = #tpu.pipeline_mode<synchronous>, transform_indices = @transform_2, window_bounds = array<i64: 8, 128>}, {transform_indices = @transform_3, window_bounds = array<i64: 1, 8, 128>}]} {
    %c0 = arith.constant 0 : index
    %c0_0 = arith.constant 0 : index
    %c0_1 = arith.constant 0 : index
    %0 = vector.load %arg1[%c0, %c0_0, %c0_1] : memref<1x36x128xf32, #tpu.memory_space<vmem>>, vector<1x36x128xf32>
    %1 = vector.shape_cast %0 : vector<1x36x128xf32> to vector<36x128xf32>
    %c0_2 = arith.constant 0 : index
    %c0_3 = arith.constant 0 : index
    %c0_4 = arith.constant 0 : index
    %2 = vector.load %arg2[%c0_2, %c0_3, %c0_4] : memref<8x36x128xf32, #tpu.memory_space<vmem>>, vector<1x36x128xf32>
    %3 = vector.shape_cast %2 : vector<1x36x128xf32> to vector<36x128xf32>
    %4 = arith.mulf %1, %3 : vector<36x128xf32>
    %cst = arith.constant dense<0.000000e+00> : vector<128xf32>
    %5 = vector.multi_reduction <add>, %4, %cst [0] : vector<36x128xf32> to vector<128xf32>
    %6 = vector.shape_cast %5 : vector<128xf32> to vector<1x128xf32>
    %c0_5 = arith.constant 0 : index
    %c0_6 = arith.constant 0 : index
    %7 = vector.load %arg3[%c0_5, %c0_6] : memref<8x128xf32, #tpu.memory_space<vmem>>, vector<1x128xf32>
    %8 = arith.addf %6, %7 : vector<1x128xf32>
    %c0_7 = arith.constant 0 : index
    %c0_8 = arith.constant 0 : index
    %c0_9 = arith.constant 0 : index
    %9 = vector.load %arg4[%c0_7, %c0_8, %c0_9] : memref<1x8x128xf32, #tpu.memory_space<vmem>>, vector<1x1x128xf32>
    %10 = vector.shape_cast %9 : vector<1x1x128xf32> to vector<1x128xf32>
    %11 = vector.shape_cast %8 : vector<1x128xf32> to vector<1x1x128xf32>
    tpu.vector_store %arg4[%c0_7, %c0_8, %c0_9], %11 {strides = array<i32>} : memref<1x8x128xf32, #tpu.memory_space<vmem>>, vector<1x1x128xf32>,
    %c1 = arith.constant 1 : index
    %c0_10 = arith.constant 0 : index
    %c0_11 = arith.constant 0 : index
    %12 = vector.load %arg2[%c1, %c0_10, %c0_11] : memref<8x36x128xf32, #tpu.memory_space<vmem>>, vector<1x36x128xf32>
    %13 = vector.shape_cast %12 : vector<1x36x128xf32> to vector<36x128xf32>
    %14 = arith.mulf %1, %13 : vector<36x128xf32>
    %cst_12 = arith.constant dense<0.000000e+00> : vector<128xf32>
    %15 = vector.multi_reduction <add>, %14, %cst_12 [0] : vector<36x128xf32> to vector<128xf32>
    %16 = vector.shape_cast %15 : vector<128xf32> to vector<1x128xf32>
    %c1_13 = arith.constant 1 : index
    %c0_14 = arith.constant 0 : index
    %17 = vector.load %arg3[%c1_13, %c0_14] : memref<8x128xf32, #tpu.memory_space<vmem>>, vector<1x128xf32>
    %18 = arith.addf %16, %17 : vector<1x128xf32>
    %c0_15 = arith.constant 0 : index
    %c1_16 = arith.constant 1 : index
    %c0_17 = arith.constant 0 : index
    %19 = vector.load %arg4[%c0_15, %c1_16, %c0_17] : memref<1x8x128xf32, #tpu.memory_space<vmem>>, vector<1x1x128xf32>
    %20 = vector.shape_cast %19 : vector<1x1x128xf32> to vector<1x128xf32>
    %21 = vector.shape_cast %18 : vector<1x128xf32> to vector<1x1x128xf32>
    tpu.vector_store %arg4[%c0_15, %c1_16, %c0_17], %21 {strides = array<i32>} : memref<1x8x128xf32, #tpu.memory_space<vmem>>, vector<1x1x128xf32>,
    %c2 = arith.constant 2 : index
    %c0_18 = arith.constant 0 : index
    %c0_19 = arith.constant 0 : index
    %22 = vector.load %arg2[%c2, %c0_18, %c0_19] : memref<8x36x128xf32, #tpu.memory_space<vmem>>, vector<1x36x128xf32>
    %23 = vector.shape_cast %22 : vector<1x36x128xf32> to vector<36x128xf32>
    %24 = arith.mulf %1, %23 : vector<36x128xf32>
    %cst_20 = arith.constant dense<0.000000e+00> : vector<128xf32>
    %25 = vector.multi_reduction <add>, %24, %cst_20 [0] : vector<36x128xf32> to vector<128xf32>
    %26 = vector.shape_cast %25 : vector<128xf32> to vector<1x128xf32>
    %c2_21 = arith.constant 2 : index
    %c0_22 = arith.constant 0 : index
    %27 = vector.load %arg3[%c2_21, %c0_22] : memref<8x128xf32, #tpu.memory_space<vmem>>, vector<1x128xf32>
    %28 = arith.addf %26, %27 : vector<1x128xf32>
    %c0_23 = arith.constant 0 : index
    %c2_24 = arith.constant 2 : index
    %c0_25 = arith.constant 0 : index
    %29 = vector.load %arg4[%c0_23, %c2_24, %c0_25] : memref<1x8x128xf32, #tpu.memory_space<vmem>>, vector<1x1x128xf32>
    %30 = vector.shape_cast %29 : vector<1x1x128xf32> to vector<1x128xf32>
    %31 = vector.shape_cast %28 : vector<1x128xf32> to vector<1x1x128xf32>
    tpu.vector_store %arg4[%c0_23, %c2_24, %c0_25], %31 {strides = array<i32>} : memref<1x8x128xf32, #tpu.memory_space<vmem>>, vector<1x1x128xf32>,
    %c3 = arith.constant 3 : index
    %c0_26 = arith.constant 0 : index
    %c0_27 = arith.constant 0 : index
    %32 = vector.load %arg2[%c3, %c0_26, %c0_27] : memref<8x36x128xf32, #tpu.memory_space<vmem>>, vector<1x36x128xf32>
    %33 = vector.shape_cast %32 : vector<1x36x128xf32> to vector<36x128xf32>
    %34 = arith.mulf %1, %33 : vector<36x128xf32>
    %cst_28 = arith.constant dense<0.000000e+00> : vector<128xf32>
    %35 = vector.multi_reduction <add>, %34, %cst_28 [0] : vector<36x128xf32> to vector<128xf32>
    %36 = vector.shape_cast %35 : vector<128xf32> to vector<1x128xf32>
    %c3_29 = arith.constant 3 : index
    %c0_30 = arith.constant 0 : index
    %37 = vector.load %arg3[%c3_29, %c0_30] : memref<8x128xf32, #tpu.memory_space<vmem>>, vector<1x128xf32>
    %38 = arith.addf %36, %37 : vector<1x128xf32>
    %c0_31 = arith.constant 0 : index
    %c3_32 = arith.constant 3 : index
    %c0_33 = arith.constant 0 : index
    %39 = vector.load %arg4[%c0_31, %c3_32, %c0_33] : memref<1x8x128xf32, #tpu.memory_space<vmem>>, vector<1x1x128xf32>
    %40 = vector.shape_cast %39 : vector<1x1x128xf32> to vector<1x128xf32>
    %41 = vector.shape_cast %38 : vector<1x128xf32> to vector<1x1x128xf32>
    tpu.vector_store %arg4[%c0_31, %c3_32, %c0_33], %41 {strides = array<i32>} : memref<1x8x128xf32, #tpu.memory_space<vmem>>, vector<1x1x128xf32>,
    %c4 = arith.constant 4 : index
    %c0_34 = arith.constant 0 : index
    %c0_35 = arith.constant 0 : index
    %42 = vector.load %arg2[%c4, %c0_34, %c0_35] : memref<8x36x128xf32, #tpu.memory_space<vmem>>, vector<1x36x128xf32>
    %43 = vector.shape_cast %42 : vector<1x36x128xf32> to vector<36x128xf32>
    %44 = arith.mulf %1, %43 : vector<36x128xf32>
    %cst_36 = arith.constant dense<0.000000e+00> : vector<128xf32>
    %45 = vector.multi_reduction <add>, %44, %cst_36 [0] : vector<36x128xf32> to vector<128xf32>
    %46 = vector.shape_cast %45 : vector<128xf32> to vector<1x128xf32>
    %c4_37 = arith.constant 4 : index
    %c0_38 = arith.constant 0 : index
    %47 = vector.load %arg3[%c4_37, %c0_38] : memref<8x128xf32, #tpu.memory_space<vmem>>, vector<1x128xf32>
    %48 = arith.addf %46, %47 : vector<1x128xf32>
    %c0_39 = arith.constant 0 : index
    %c4_40 = arith.constant 4 : index
    %c0_41 = arith.constant 0 : index
    %49 = vector.load %arg4[%c0_39, %c4_40, %c0_41] : memref<1x8x128xf32, #tpu.memory_space<vmem>>, vector<1x1x128xf32>
    %50 = vector.shape_cast %49 : vector<1x1x128xf32> to vector<1x128xf32>
    %51 = vector.shape_cast %48 : vector<1x128xf32> to vector<1x1x128xf32>
    tpu.vector_store %arg4[%c0_39, %c4_40, %c0_41], %51 {strides = array<i32>} : memref<1x8x128xf32, #tpu.memory_space<vmem>>, vector<1x1x128xf32>,
    %c5 = arith.constant 5 : index
    %c0_42 = arith.constant 0 : index
    %c0_43 = arith.constant 0 : index
    %52 = vector.load %arg2[%c5, %c0_42, %c0_43] : memref<8x36x128xf32, #tpu.memory_space<vmem>>, vector<1x36x128xf32>
    %53 = vector.shape_cast %52 : vector<1x36x128xf32> to vector<36x128xf32>
    %54 = arith.mulf %1, %53 : vector<36x128xf32>
    %cst_44 = arith.constant dense<0.000000e+00> : vector<128xf32>
    %55 = vector.multi_reduction <add>, %54, %cst_44 [0] : vector<36x128xf32> to vector<128xf32>
    %56 = vector.shape_cast %55 : vector<128xf32> to vector<1x128xf32>
    %c5_45 = arith.constant 5 : index
    %c0_46 = arith.constant 0 : index
    %57 = vector.load %arg3[%c5_45, %c0_46] : memref<8x128xf32, #tpu.memory_space<vmem>>, vector<1x128xf32>
    %58 = arith.addf %56, %57 : vector<1x128xf32>
    %c0_47 = arith.constant 0 : index
    %c5_48 = arith.constant 5 : index
    %c0_49 = arith.constant 0 : index
    %59 = vector.load %arg4[%c0_47, %c5_48, %c0_49] : memref<1x8x128xf32, #tpu.memory_space<vmem>>, vector<1x1x128xf32>
    %60 = vector.shape_cast %59 : vector<1x1x128xf32> to vector<1x128xf32>
    %61 = vector.shape_cast %58 : vector<1x128xf32> to vector<1x1x128xf32>
    tpu.vector_store %arg4[%c0_47, %c5_48, %c0_49], %61 {strides = array<i32>} : memref<1x8x128xf32, #tpu.memory_space<vmem>>, vector<1x1x128xf32>,
    %c6 = arith.constant 6 : index
    %c0_50 = arith.constant 0 : index
    %c0_51 = arith.constant 0 : index
    %62 = vector.load %arg2[%c6, %c0_50, %c0_51] : memref<8x36x128xf32, #tpu.memory_space<vmem>>, vector<1x36x128xf32>
    %63 = vector.shape_cast %62 : vector<1x36x128xf32> to vector<36x128xf32>
    %64 = arith.mulf %1, %63 : vector<36x128xf32>
    %cst_52 = arith.constant dense<0.000000e+00> : vector<128xf32>
    %65 = vector.multi_reduction <add>, %64, %cst_52 [0] : vector<36x128xf32> to vector<128xf32>
    %66 = vector.shape_cast %65 : vector<128xf32> to vector<1x128xf32>
    %c6_53 = arith.constant 6 : index
    %c0_54 = arith.constant 0 : index
    %67 = vector.load %arg3[%c6_53, %c0_54] : memref<8x128xf32, #tpu.memory_space<vmem>>, vector<1x128xf32>
    %68 = arith.addf %66, %67 : vector<1x128xf32>
    %c0_55 = arith.constant 0 : index
    %c6_56 = arith.constant 6 : index
    %c0_57 = arith.constant 0 : index
    %69 = vector.load %arg4[%c0_55, %c6_56, %c0_57] : memref<1x8x128xf32, #tpu.memory_space<vmem>>, vector<1x1x128xf32>
    %70 = vector.shape_cast %69 : vector<1x1x128xf32> to vector<1x128xf32>
    %71 = vector.shape_cast %68 : vector<1x128xf32> to vector<1x1x128xf32>
    tpu.vector_store %arg4[%c0_55, %c6_56, %c0_57], %71 {strides = array<i32>} : memref<1x8x128xf32, #tpu.memory_space<vmem>>, vector<1x1x128xf32>,
    %c7 = arith.constant 7 : index
    %c0_58 = arith.constant 0 : index
    %c0_59 = arith.constant 0 : index
    %72 = vector.load %arg2[%c7, %c0_58, %c0_59] : memref<8x36x128xf32, #tpu.memory_space<vmem>>, vector<1x36x128xf32>
    %73 = vector.shape_cast %72 : vector<1x36x128xf32> to vector<36x128xf32>
    %74 = arith.mulf %1, %73 : vector<36x128xf32>
    %cst_60 = arith.constant dense<0.000000e+00> : vector<128xf32>
    %75 = vector.multi_reduction <add>, %74, %cst_60 [0] : vector<36x128xf32> to vector<128xf32>
    %76 = vector.shape_cast %75 : vector<128xf32> to vector<1x128xf32>
    %c7_61 = arith.constant 7 : index
    %c0_62 = arith.constant 0 : index
    %77 = vector.load %arg3[%c7_61, %c0_62] : memref<8x128xf32, #tpu.memory_space<vmem>>, vector<1x128xf32>
    %78 = arith.addf %76, %77 : vector<1x128xf32>
    %c0_63 = arith.constant 0 : index
    %c7_64 = arith.constant 7 : index
    %c0_65 = arith.constant 0 : index
    %79 = vector.load %arg4[%c0_63, %c7_64, %c0_65] : memref<1x8x128xf32, #tpu.memory_space<vmem>>, vector<1x1x128xf32>
    %80 = vector.shape_cast %79 : vector<1x1x128xf32> to vector<1x128xf32>
    %81 = vector.shape_cast %78 : vector<1x128xf32> to vector<1x1x128xf32>
    tpu.vector_store %arg4[%c0_63, %c7_64, %c0_65], %81 {strides = array<i32>} : memref<1x8x128xf32, #tpu.memory_space<vmem>>, vector<1x1x128xf32>,
    return
  }
  func.func @transform_0(%arg0: i32) -> (i32, i32, i32) {
    %c0_i32 = arith.constant 0 : i32
    %c0_i32_0 = arith.constant 0 : i32
    %c0_i32_1 = arith.constant 0 : i32
    return %arg0, %c0_i32, %c0_i32_0 : i32, i32, i32
  }
  func.func @transform_1(%arg0: i32) -> (i32, i32, i32) {
    %c0_i32 = arith.constant 0 : i32
    %c0_i32_0 = arith.constant 0 : i32
    %c0_i32_1 = arith.constant 0 : i32
    %c0_i32_2 = arith.constant 0 : i32
    return %c0_i32, %c0_i32_0, %c0_i32_1 : i32, i32, i32
  }
  func.func @transform_2(%arg0: i32) -> (i32, i32) {
    %c0_i32 = arith.constant 0 : i32
    %c0_i32_0 = arith.constant 0 : i32
    %c0_i32_1 = arith.constant 0 : i32
    return %c0_i32, %c0_i32_0 : i32, i32
  }
  func.func @transform_3(%arg0: i32) -> (i32, i32, i32) {
    %c0_i32 = arith.constant 0 : i32
    %c0_i32_0 = arith.constant 0 : i32
    %c0_i32_1 = arith.constant 0 : i32
    return %arg0, %c0_i32, %c0_i32_0 : i32, i32, i32
  }
}

</mosaic_0001>

<llo_original>
// kernel: locally_connected_2d.1
$region0: #{locally_connected_2d.1}
  #allocation0 [shape = 'u32[]', space=smem, size = 0x4, offset = 0x4, fixed_abs, tag = 'smem constant byte address 0x4 - core index']
  #allocation1 [shape = 'u32[144,128]{1,0:T(1,128)}', space=vmem, size = 0x12000, scoped, tag = 'internal scratch']
  %s0 = inlined_call_operand.vmem [shape: f32[2,36,128], index: 0, kind: input, shape index: {}]
  %s1 = inlined_call_operand.vmem [shape: f32[8,36,128], index: 1, kind: input, shape index: {}]
  %s2 = inlined_call_operand.vmem [shape: f32[8,128], index: 2, kind: input, shape index: {}]
  %s3 = inlined_call_operand.vmem [shape: f32[2,8,128], index: 3, kind: output, shape index: {}]
  %s4 = sld [smem:[#allocation0]]
  $region45: #{locally_connected_2d.1} parent=0
    _
  %s6 = ssub.s32 1, %s4
  %s7 = scalar_select 0, %s6, %s4
  loop: start=0, step=1, limit=4
  $region2: #{locally_connected_2d.1} parent=0 // loop_pre_header
    _
  $region3: #{locally_connected_2d.1} parent=0 // loop_header
    %s9 = sphi 0, %s13
    %p10 = scmp.ge.s32.totalorder %s9, 4
    %s19 = sphi 0, %s21
    %s22 = sphi 0, %s19
    %s23 = sphi 0, %s22
    %s39 = sphi 0, %s23
    %s43 = sphi 0, %s43
    %s45 = sphi 0, %s43
    %s46 = sphi 0, %s45
    %s60 = sphi 0, %s46
    %s64 = sphi 0, %s64
    %s66 = sphi 0, %s64
    %s67 = sphi 0, %s66
    %s81 = sphi 0, %s67
    %s87 = sphi 0, %s89
    %s90 = sphi 0, %s87
    %s91 = sphi 0, %s90
    %s107 = sphi 0, %s91
  $region4: #{locally_connected_2d.1} parent=0 // loop_header_branch
    %12 = sbr.rel (%p10) target = $region8
  $region5: #{locally_connected_2d.1} parent=0 // loop_body
    %s14 = ssub.s32 %s9, 1
    %s15 = ssub.s32 %s9, 2
    %s16 = sadd.s32 %s9, 1
    %s17 = ssub.s32 %s9, %s16
    %p18 = scmp.eq.s32.totalorder %s17, 0
    %s20 = sadd.s32 %s19, 1
    %s21 = scalar_select %p18, %s19, %s20
    %p24 = pneg %p18
    %p25 = scmp.eq.s32.totalorder %s9, 1
    %p26 = por %p24, %p25
    %p27 = scmp.ne.s32.totalorder %s19, %s22
    %p28 = scmp.eq.s32.totalorder %s9, 0
    %p29 = por %p27, %p28
    %p30 = scmp.ne.s32.totalorder %s19, %s22
    %p31 = scmp.eq.s32.totalorder %s14, 1
    %p32 = por %p30, %p31
    %p33 = scmp.ne.s32.totalorder %s22, %s23
    %p34 = scmp.eq.s32.totalorder %s14, 0
    %p35 = por %p33, %p34
    %p36 = scmp.ne.s32.totalorder %s22, %s23
    %p37 = scmp.eq.s32.totalorder %s15, 1
    %p38 = por %p36, %p37
    %p40 = scmp.ne.s32.totalorder %s23, %s39
    %p41 = scmp.eq.s32.totalorder %s15, 0
    %p42 = por %p40, %p41
    %s44 = sadd.s32 %s43, 1
    %p47 = scmp.eq.s32.totalorder %s9, 1
    %p48 = scmp.ne.s32.totalorder %s43, %s45
    %p49 = scmp.eq.s32.totalorder %s9, 0
    %p50 = por %p48, %p49
    %p51 = scmp.ne.s32.totalorder %s43, %s45
    %p52 = scmp.eq.s32.totalorder %s14, 1
    %p53 = por %p51, %p52
    %p54 = scmp.ne.s32.totalorder %s45, %s46
    %p55 = scmp.eq.s32.totalorder %s14, 0
    %p56 = por %p54, %p55
    %p57 = scmp.ne.s32.totalorder %s45, %s46
    %p58 = scmp.eq.s32.totalorder %s15, 1
    %p59 = por %p57, %p58
    %p61 = scmp.ne.s32.totalorder %s46, %s60
    %p62 = scmp.eq.s32.totalorder %s15, 0
    %p63 = por %p61, %p62
    %s65 = sadd.s32 %s64, 1
    %p68 = scmp.eq.s32.totalorder %s9, 1
    %p69 = scmp.ne.s32.totalorder %s64, %s66
    %p70 = scmp.eq.s32.totalorder %s9, 0
    %p71 = por %p69, %p70
    %p72 = scmp.ne.s32.totalorder %s64, %s66
    %p73 = scmp.eq.s32.totalorder %s14, 1
    %p74 = por %p72, %p73
    %p75 = scmp.ne.s32.totalorder %s66, %s67
    %p76 = scmp.eq.s32.totalorder %s14, 0
    %p77 = por %p75, %p76
    %p78 = scmp.ne.s32.totalorder %s66, %s67
    %p79 = scmp.eq.s32.totalorder %s15, 1
    %p80 = por %p78, %p79
    %p82 = scmp.ne.s32.totalorder %s67, %s81
    %p83 = scmp.eq.s32.totalorder %s15, 0
    %p84 = por %p82, %p83
    %s85 = ssub.s32 %s9, %s16
    %p86 = scmp.eq.s32.totalorder %s85, 0
    %s88 = sadd.s32 %s87, 1
    %s89 = scalar_select %p86, %s87, %s88
    %p92 = pneg %p86
    %p93 = scmp.eq.s32.totalorder %s9, 1
    %p94 = por %p92, %p93
    %p95 = scmp.ne.s32.totalorder %s87, %s90
    %p96 = scmp.eq.s32.totalorder %s9, 0
    %p97 = por %p95, %p96
    %p98 = scmp.ne.s32.totalorder %s87, %s90
    %p99 = scmp.eq.s32.totalorder %s14, 1
    %p100 = por %p98, %p99
    %p101 = scmp.ne.s32.totalorder %s90, %s91
    %p102 = scmp.eq.s32.totalorder %s14, 0
    %p103 = por %p101, %p102
    %p104 = scmp.ne.s32.totalorder %s90, %s91
    %p105 = scmp.eq.s32.totalorder %s15, 1
    %p106 = por %p104, %p105
    %p108 = scmp.ne.s32.totalorder %s91, %s107
    %p109 = scmp.eq.s32.totalorder %s15, 0
    %p110 = por %p108, %p109
    %p111 = scmp.le.s32.totalorder 1, %s9
    %p112 = scmp.lt.s32.totalorder %s9, 3
    %p113 = pnand %p111, %p112
    %p114 = pneg %p113
    // Predicated region
    $region9: #{locally_connected_2d.1} parent=5 // pred_check
      _
    $region10: #{locally_connected_2d.1} parent=5 // pred_check_branch
      %116 = sbr.rel (%p113) target = $region12
    $region11: #{locally_connected_2d.1} parent=5 // pred_region
      %s117 = ssub.s32 %s9, 1
      // Predicated region
      $region13: #{locally_connected_2d.1} parent=11 // pred_check
        %p118 = pneg %p56
      $region14: #{locally_connected_2d.1} parent=11 // pred_check_branch
        %120 = sbr.rel (%p118) target = $region16
      $region15: #{locally_connected_2d.1} parent=11 // pred_region
        _
      $region16: #{locally_connected_2d.1} parent=11 // pred_fallthru
        _
      // Predicated region
      $region17: #{locally_connected_2d.1} parent=11 // pred_check
        %p121 = pneg %p77
      $region18: #{locally_connected_2d.1} parent=11 // pred_check_branch
        %123 = sbr.rel (%p121) target = $region20
      $region19: #{locally_connected_2d.1} parent=11 // pred_region
        _
      $region20: #{locally_connected_2d.1} parent=11 // pred_fallthru
        _
    $region12: #{locally_connected_2d.1} parent=5 // pred_fallthru
      _
    %p124 = scmp.lt.s32.totalorder %s9, 2
    // Predicated region
    $region21: #{locally_connected_2d.1} parent=5 // pred_check
      %p125 = pneg %p124
    $region22: #{locally_connected_2d.1} parent=5 // pred_check_branch
      %127 = sbr.rel (%p125) target = $region24
    $region23: #{locally_connected_2d.1} parent=5 // pred_region
      // Predicated region
      $region25: #{locally_connected_2d.1} parent=23 // pred_check
        %p128 = pneg %p29
      $region26: #{locally_connected_2d.1} parent=23 // pred_check_branch
        %130 = sbr.rel (%p128) target = $region28
      $region27: #{locally_connected_2d.1} parent=23 // pred_region
        %p131 = scmp.lt.s32.totalorder %s9, 1
        %s132 = scalar_select %p131, %s9, 1
        %s133 = smul.addr %s132, 5
        %s134 = smul.addr %s133, 8
        %s135 = scalar_lea.vmem %s0, %s134
      $region28: #{locally_connected_2d.1} parent=23 // pred_fallthru
        _
    $region24: #{locally_connected_2d.1} parent=5 // pred_fallthru
      _
    %p136 = scmp.le.s32.totalorder 1, %s9
    %p137 = scmp.lt.s32.totalorder %s9, 3
    %p138 = pnand %p136, %p137
    %p139 = pneg %p138
    // Predicated region
    $region29: #{locally_connected_2d.1} parent=5 // pred_check
      _
    $region30: #{locally_connected_2d.1} parent=5 // pred_check_branch
      %141 = sbr.rel (%p138) target = $region32
    $region31: #{locally_connected_2d.1} parent=5 // pred_region
      %s142 = ssub.s32 %s9, 1
      %p143 = scmp.lt.s32.totalorder %s14, 1
      %s144 = scalar_select %p143, %s14, 1
      %s145 = smul.addr %s144, 5
      %s146 = smul.addr %s145, 8
      %s147 = scalar_lea.vmem %s0, %s146
      %p148 = pneg %p35
      %p149 = pneg %p32
      %p150 = pneg %p56
      %p151 = pneg %p53
      %p152 = pneg %p77
      %p153 = pneg %p74
      %p154 = pneg %p103
      %p155 = pneg %p100
      %p156 = scmp.lt.s32.totalorder %s14, 1
      %s157 = scalar_select %p156, %s14, 1
      %s158 = smul.addr %s157, 8
      %s159 = scalar_lea.vmem %s3, %s158
      %p160 = scmp.lt.s32.totalorder %s14, 1
      %s161 = scalar_select %p160, %s14, 1
      %s162 = smul.addr %s161, 5
      %s163 = smul.addr %s162, 8
      %s164 = scalar_lea.vmem %s0, %s163
      %p165 = scmp.lt.s32.totalorder %s14, 1
      %s166 = scalar_select %p165, %s14, 1
      %s167 = smul.addr %s166, 8
      %s168 = scalar_lea.vmem %s3, %s167
      %v169 = vld [vmem:[%s164] sm:$0xff]
      %v170 = vld [vmem:[%s164 + $0x8] sm:$0xff]
      %v171 = vld [vmem:[%s164 + $0x10] sm:$0xff]
      %v172 = vld [vmem:[%s164 + $0x18] sm:$0xff]
      %v173 = vld [vmem:[%s164 + $0x20] sm:$0xf]
      %v174 = vld [vmem:[%s1] sm:$0xff]
      %v175 = vld [vmem:[%s1 + $0x8] sm:$0xff]
      %v176 = vld [vmem:[%s1 + $0x10] sm:$0xff]
      %v177 = vld [vmem:[%s1 + $0x18] sm:$0xff]
      %v178 = vld [vmem:[%s1 + $0x20] sm:$0xf]
      %v179 = vmul.f32 %v169, %v174
      %v180 = vmul.f32 %v170, %v175
      %v181 = vmul.f32 %v171, %v176
      %v182 = vmul.f32 %v172, %v177
      %v183 = vmul.f32 %v173, %v178
      %v184 = vadd.f32 %v179, %v180
      %v185 = vadd.f32 %v184, %v181
      %v186 = vadd.f32 %v185, %v182
      %vm187 = vcmask 1043456
      %v188 = vsel %vm187, %v183, 0.0
      %v189 = vadd.f32 %v186, %v188
      %v190 = vrot.slane %v189, 4
      %v191 = vadd.f32 %v189, %v190
      %v192 = vrot.slane %v191, 2
      %v193 = vadd.f32 %v191, %v192
      %v194 = vrot.slane %v193, 1
      %v195 = vadd.f32 %v193, %v194
      %v196 = vld [vmem:[%s2] sm:$0x1]
      %v197 = vadd.f32 %v195, %v196
      %198 = vst [vmem:[%s168] sm:$0x1] %v197
      %s199 = scalar_lea.vmem %s1, 40
      %v200 = vld [vmem:[%s199] sm:$0xff]
      %v201 = vld [vmem:[%s199 + $0x8] sm:$0xff]
      %v202 = vld [vmem:[%s199 + $0x10] sm:$0xff]
      %v203 = vld [vmem:[%s199 + $0x18] sm:$0xff]
      %v204 = vld [vmem:[%s199 + $0x20] sm:$0xf]
      %v205 = vmul.f32 %v169, %v200
      %v206 = vmul.f32 %v170, %v201
      %v207 = vmul.f32 %v171, %v202
      %v208 = vmul.f32 %v172, %v203
      %v209 = vmul.f32 %v173, %v204
      %v210 = vadd.f32 %v205, %v206
      %v211 = vadd.f32 %v210, %v207
      %v212 = vadd.f32 %v211, %v208
      %v213 = vsel %vm187, %v209, 0.0
      %v214 = vadd.f32 %v212, %v213
      %v215 = vrot.slane %v214, 4
      %v216 = vadd.f32 %v214, %v215
      %v217 = vrot.slane %v216, 2
      %v218 = vadd.f32 %v216, %v217
      %v219 = vrot.slane %v218, 1
      %v220 = vadd.f32 %v218, %v219
      %v221 = vld [vmem:[%s2 + $0x1] sm:$0x1]
      %v222 = vadd.f32 %v220, %v221
      %223 = vst [vmem:[%s168 + $0x1] sm:$0x1] %v222
      %s224 = scalar_lea.vmem %s1, 80
      %v225 = vld [vmem:[%s224] sm:$0xff]
      %v226 = vld [vmem:[%s224 + $0x8] sm:$0xff]
      %v227 = vld [vmem:[%s224 + $0x10] sm:$0xff]
      %v228 = vld [vmem:[%s224 + $0x18] sm:$0xff]
      %v229 = vld [vmem:[%s224 + $0x20] sm:$0xf]
      %v230 = vmul.f32 %v169, %v225
      %v231 = vmul.f32 %v170, %v226
      %v232 = vmul.f32 %v171, %v227
      %v233 = vmul.f32 %v172, %v228
      %v234 = vmul.f32 %v173, %v229
      %v235 = vadd.f32 %v230, %v231
      %v236 = vadd.f32 %v235, %v232
      %v237 = vadd.f32 %v236, %v233
      %v238 = vsel %vm187, %v234, 0.0
      %v239 = vadd.f32 %v237, %v238
      %v240 = vrot.slane %v239, 4
      %v241 = vadd.f32 %v239, %v240
      %v242 = vrot.slane %v241, 2
      %v243 = vadd.f32 %v241, %v242
      %v244 = vrot.slane %v243, 1
      %v245 = vadd.f32 %v243, %v244
      %v246 = vld [vmem:[%s2 + $0x2] sm:$0x1]
      %v247 = vadd.f32 %v245, %v246
      %248 = vst [vmem:[%s168 + $0x2] sm:$0x1] %v247
      %s249 = scalar_lea.vmem %s1, 120
      %v250 = vld [vmem:[%s249] sm:$0xff]
      %v251 = vld [vmem:[%s249 + $0x8] sm:$0xff]
      %v252 = vld [vmem:[%s249 + $0x10] sm:$0xff]
      %v253 = vld [vmem:[%s249 + $0x18] sm:$0xff]
      %v254 = vld [vmem:[%s249 + $0x20] sm:$0xf]
      %v255 = vmul.f32 %v169, %v250
      %v256 = vmul.f32 %v170, %v251
      %v257 = vmul.f32 %v171, %v252
      %v258 = vmul.f32 %v172, %v253
      %v259 = vmul.f32 %v173, %v254
      %v260 = vadd.f32 %v255, %v256
      %v261 = vadd.f32 %v260, %v257
      %v262 = vadd.f32 %v261, %v258
      %v263 = vsel %vm187, %v259, 0.0
      %v264 = vadd.f32 %v262, %v263
      %v265 = vrot.slane %v264, 4
      %v266 = vadd.f32 %v264, %v265
      %v267 = vrot.slane %v266, 2
      %v268 = vadd.f32 %v266, %v267
      %v269 = vrot.slane %v268, 1
      %v270 = vadd.f32 %v268, %v269
      %v271 = vld [vmem:[%s2 + $0x3] sm:$0x1]
      %v272 = vadd.f32 %v270, %v271
      %273 = vst [vmem:[%s168 + $0x3] sm:$0x1] %v272
      %s274 = scalar_lea.vmem %s1, 160
      %v275 = vld [vmem:[%s274] sm:$0xff]
      %v276 = vld [vmem:[%s274 + $0x8] sm:$0xff]
      %v277 = vld [vmem:[%s274 + $0x10] sm:$0xff]
      %v278 = vld [vmem:[%s274 + $0x18] sm:$0xff]
      %v279 = vld [vmem:[%s274 + $0x20] sm:$0xf]
      %v280 = vmul.f32 %v169, %v275
      %v281 = vmul.f32 %v170, %v276
      %v282 = vmul.f32 %v171, %v277
      %v283 = vmul.f32 %v172, %v278
      %v284 = vmul.f32 %v173, %v279
      %v285 = vadd.f32 %v280, %v281
      %v286 = vadd.f32 %v285, %v282
      %v287 = vadd.f32 %v286, %v283
      %v288 = vsel %vm187, %v284, 0.0
      %v289 = vadd.f32 %v287, %v288
      %v290 = vrot.slane %v289, 4
      %v291 = vadd.f32 %v289, %v290
      %v292 = vrot.slane %v291, 2
      %v293 = vadd.f32 %v291, %v292
      %v294 = vrot.slane %v293, 1
      %v295 = vadd.f32 %v293, %v294
      %v296 = vld [vmem:[%s2 + $0x4] sm:$0x1]
      %v297 = vadd.f32 %v295, %v296
      %298 = vst [vmem:[%s168 + $0x4] sm:$0x1] %v297
      %s299 = scalar_lea.vmem %s1, 200
      %v300 = vld [vmem:[%s299] sm:$0xff]
      %v301 = vld [vmem:[%s299 + $0x8] sm:$0xff]
      %v302 = vld [vmem:[%s299 + $0x10] sm:$0xff]
      %v303 = vld [vmem:[%s299 + $0x18] sm:$0xff]
      %v304 = vld [vmem:[%s299 + $0x20] sm:$0xf]
      %v305 = vmul.f32 %v169, %v300
      %v306 = vmul.f32 %v170, %v301
      %v307 = vmul.f32 %v171, %v302
      %v308 = vmul.f32 %v172, %v303
      %v309 = vmul.f32 %v173, %v304
      %v310 = vadd.f32 %v305, %v306
      %v311 = vadd.f32 %v310, %v307
      %v312 = vadd.f32 %v311, %v308
      %v313 = vsel %vm187, %v309, 0.0
      %v314 = vadd.f32 %v312, %v313
      %v315 = vrot.slane %v314, 4
      %v316 = vadd.f32 %v314, %v315
      %v317 = vrot.slane %v316, 2
      %v318 = vadd.f32 %v316, %v317
      %v319 = vrot.slane %v318, 1
      %v320 = vadd.f32 %v318, %v319
      %v321 = vld [vmem:[%s2 + $0x5] sm:$0x1]
      %v322 = vadd.f32 %v320, %v321
      %323 = vst [vmem:[%s168 + $0x5] sm:$0x1] %v322
      %s324 = scalar_lea.vmem %s1, 240
      %v325 = vld [vmem:[%s324] sm:$0xff]
      %v326 = vld [vmem:[%s324 + $0x8] sm:$0xff]
      %v327 = vld [vmem:[%s324 + $0x10] sm:$0xff]
      %v328 = vld [vmem:[%s324 + $0x18] sm:$0xff]
      %v329 = vld [vmem:[%s324 + $0x20] sm:$0xf]
      %v330 = vmul.f32 %v169, %v325
      %v331 = vmul.f32 %v170, %v326
      %v332 = vmul.f32 %v171, %v327
      %v333 = vmul.f32 %v172, %v328
      %v334 = vmul.f32 %v173, %v329
      %v335 = vadd.f32 %v330, %v331
      %v336 = vadd.f32 %v335, %v332
      %v337 = vadd.f32 %v336, %v333
      %v338 = vsel %vm187, %v334, 0.0
      %v339 = vadd.f32 %v337, %v338
      %v340 = vrot.slane %v339, 4
      %v341 = vadd.f32 %v339, %v340
      %v342 = vrot.slane %v341, 2
      %v343 = vadd.f32 %v341, %v342
      %v344 = vrot.slane %v343, 1
      %v345 = vadd.f32 %v343, %v344
      %v346 = vld [vmem:[%s2 + $0x6] sm:$0x1]
      %v347 = vadd.f32 %v345, %v346
      %348 = vst [vmem:[%s168 + $0x6] sm:$0x1] %v347
      %s349 = scalar_lea.vmem %s1, 280
      %v350 = vld [vmem:[%s349] sm:$0xff]
      %v351 = vld [vmem:[%s349 + $0x8] sm:$0xff]
      %v352 = vld [vmem:[%s349 + $0x10] sm:$0xff]
      %v353 = vld [vmem:[%s349 + $0x18] sm:$0xff]
      %v354 = vld [vmem:[%s349 + $0x20] sm:$0xf]
      %v355 = vmul.f32 %v169, %v350
      %v356 = vmul.f32 %v170, %v351
      %v357 = vmul.f32 %v171, %v352
      %v358 = vmul.f32 %v172, %v353
      %v359 = vmul.f32 %v173, %v354
      %v360 = vadd.f32 %v355, %v356
      %v361 = vadd.f32 %v360, %v357
      %v362 = vadd.f32 %v361, %v358
      %v363 = vsel %vm187, %v359, 0.0
      %v364 = vadd.f32 %v362, %v363
      %v365 = vrot.slane %v364, 4
      %v366 = vadd.f32 %v364, %v365
      %v367 = vrot.slane %v366, 2
      %v368 = vadd.f32 %v366, %v367
      %v369 = vrot.slane %v368, 1
      %v370 = vadd.f32 %v368, %v369
      %v371 = vld [vmem:[%s2 + $0x7] sm:$0x1]
      %v372 = vadd.f32 %v370, %v371
      %373 = vst [vmem:[%s168 + $0x7] sm:$0x1] %v372
      %p374 = scmp.lt.s32.totalorder %s14, 1
      %s375 = scalar_select %p374, %s14, 1
      %s376 = smul.addr %s375, 8
      %s377 = scalar_lea.vmem %s3, %s376
      // Predicated region
      $region33: #{locally_connected_2d.1} parent=31 // pred_check
        %p378 = pneg %p100
      $region34: #{locally_connected_2d.1} parent=31 // pred_check_branch
        %380 = sbr.rel (%p378) target = $region36
      $region35: #{locally_connected_2d.1} parent=31 // pred_region
        _
      $region36: #{locally_connected_2d.1} parent=31 // pred_fallthru
        _
    $region32: #{locally_connected_2d.1} parent=5 // pred_fallthru
      _
    %p381 = scmp.le.s32.totalorder 2, %s9
    // Predicated region
    $region37: #{locally_connected_2d.1} parent=5 // pred_check
      %p382 = pneg %p381
    $region38: #{locally_connected_2d.1} parent=5 // pred_check_branch
      %384 = sbr.rel (%p382) target = $region40
    $region39: #{locally_connected_2d.1} parent=5 // pred_region
      %s385 = ssub.s32 %s9, 2
      // Predicated region
      $region41: #{locally_connected_2d.1} parent=39 // pred_check
        %p386 = pneg %p106
      $region42: #{locally_connected_2d.1} parent=39 // pred_check_branch
        %388 = sbr.rel (%p386) target = $region44
      $region43: #{locally_connected_2d.1} parent=39 // pred_region
        %p389 = scmp.lt.s32.totalorder %s15, 1
        %s390 = scalar_select %p389, %s15, 1
        %s391 = smul.addr %s390, 8
        %s392 = scalar_lea.vmem %s3, %s391
      $region44: #{locally_connected_2d.1} parent=39 // pred_fallthru
        _
    $region40: #{locally_connected_2d.1} parent=5 // pred_fallthru
      _
  $region6: #{locally_connected_2d.1} parent=0 // loop_footer
    %s13 = sadd.s32 1, %s9
  $region7: #{locally_connected_2d.1} parent=0 // loop_footer_branch
    %8 = sbr.rel target = $region3
  $region8: #{locally_connected_2d.1} parent=0 // loop_exit
    _

</llo_original>
